<compile_context>
chip_gen: v6e
topology: v6e:2x2x1
jax: 0.10.0
libtpu: 0.0.40
codegen_flags: <defaults>
</compile_context>

<pallas_src>
import jax
import jax.numpy as jnp
from jax.experimental import pallas as pl
from jax.experimental.pallas import tpu as pltpu

HIDDEN = 128
OUT_PAD = 8   # output columns padded 2 -> 8 (lane-cheap, legal full-dim block)


# ---------------------------------------------------------------------------
# Pallas kernel: fused 5-layer MLP (rank-1 layer 1, 3x MXU hidden, 8-wide out)
# ---------------------------------------------------------------------------
def flownet_mlp_kernel(
    x_ref, t_ref,
    w1_ref, b1_ref,
    w2_ref, b2_ref,
    w3_ref, b3_ref,
    w4_ref, b4_ref,
    w5_ref, b5_ref,
    out_ref,
):
    x = x_ref[...]                      # (TB, 2)   f32
    t = t_ref[...]                      # (TB, 1)   f32
    w1 = w1_ref[...]                    # (8, 128)  f32, rows 3..7 are zero pad

    # Layer 1 (in=3): three VPU rank-1 updates instead of a K=3 MXU pass.
    # (x columns are lane-broadcast; cheap, but see review note re XLU slot.)
    h = (x[:, 0:1] * w1[0:1, :]
         + x[:, 1:2] * w1[1:2, :]
         + t * w1[2:3, :]
         + b1_ref[...])
    h = jnp.maximum(h, 0.0)             # (TB, 128) f32

    # Hidden layers 2-4: bf16 operands on the MXU, f32 accumulate, ReLU on VPU.
    for w_ref, b_ref in ((w2_ref, b2_ref), (w3_ref, b3_ref), (w4_ref, b4_ref)):
        h = jnp.dot(h.astype(jnp.bfloat16), w_ref[...],
                    preferred_element_type=jnp.float32) + b_ref[...]
        h = jnp.maximum(h, 0.0)

    # Output layer: (128, 8) zero-padded weights -> (TB, 8) store.
    out_ref[...] = (
        jnp.dot(h.astype(jnp.bfloat16), w5_ref[...],
                preferred_element_type=jnp.float32)
        + b5_ref[...]
    )


# ---------------------------------------------------------------------------
# Parameter init (PyTorch nn.Linear-style U(-1/sqrt(fan_in), 1/sqrt(fan_in)),
# weights stored as [in, out]) and one-time prep (pad / cast for the kernel).
# ---------------------------------------------------------------------------
def init_flownet_params(key):
    dims = [(3, HIDDEN), (HIDDEN, HIDDEN), (HIDDEN, HIDDEN),
            (HIDDEN, HIDDEN), (HIDDEN, 2)]
    params = []
    for fan_in, fan_out in dims:
        key, kw, kb = jax.random.split(key, 3)
        bound = 1.0 / float(fan_in) ** 0.5
        w = jax.random.uniform(kw, (fan_in, fan_out), jnp.float32, -bound, bound)
        b = jax.random.uniform(kb, (1, fan_out), jnp.float32, -bound, bound)
        params.append((w, b))
    return params


def prepare_flownet_params(params):
    """Pad/cast params once, outside the hot path."""
    (w1, b1), (w2, b2), (w3, b3), (w4, b4), (w5, b5) = params

    # Layer 1 runs on the VPU in f32; pad 3 rows -> 8 sublanes with zeros.
    w1p = jnp.zeros((8, HIDDEN), jnp.float32).at[:3, :].set(w1)

    # Hidden weights -> bf16 (MXU-native); biases stay f32.
    w2p = w2.astype(jnp.bfloat16)
    w3p = w3.astype(jnp.bfloat16)
    w4p = w4.astype(jnp.bfloat16)

    # Output layer zero-padded 2 -> OUT_PAD columns, bf16 weights, f32 bias.
    w5p = (jnp.zeros((HIDDEN, OUT_PAD), jnp.float32)
           .at[:, :2].set(w5).astype(jnp.bfloat16))
    b5p = jnp.zeros((1, OUT_PAD), jnp.float32).at[:, :2].set(b5)

    return [w1p, b1, w2p, b2, w3p, b3, w4p, b4, w5p, b5p]


# ---------------------------------------------------------------------------
# Wrapper: t expand in plain JAX, hot path in the kernel.
# ---------------------------------------------------------------------------
def _round_up(n, m):
    return ((n + m - 1) // m) * m


def flownet_forward(x, t, prepared_params, *, tile_b=2048):
    B = x.shape[0]
    x = x.astype(jnp.float32)
    # Same semantics as torch `t.expand(B, 1)`: scalar / (1,1) / (B,) / (B,1).
    t_col = jnp.broadcast_to(jnp.reshape(t, (-1, 1)), (B, 1)).astype(jnp.float32)

    # Largest tile that (a) respects tile_b, (b) covers B, and (c) keeps >= 2
    # grid steps whenever B > 8 so v7x's two TensorCores both get work.
    tb = min(tile_b, _round_up(B, 8), _round_up(pl.cdiv(B, 2), 8))
    tb = max(tb, 8)
    grid = (pl.cdiv(B, tb),)

    def resident(shape):
        return pl.BlockSpec(shape, lambda i: (0, 0))      # stays in VMEM

    in_specs = [
        pl.BlockSpec((tb, 2), lambda i: (i, 0)),            # x tile
        pl.BlockSpec((tb, 1), lambda i: (i, 0)),            # t tile
        resident((8, HIDDEN)), resident((1, HIDDEN)),       # w1, b1
        resident((HIDDEN, HIDDEN)), resident((1, HIDDEN)),  # w2, b2
        resident((HIDDEN, HIDDEN)), resident((1, HIDDEN)),  # w3, b3
        resident((HIDDEN, HIDDEN)), resident((1, HIDDEN)),  # w4, b4
        resident((HIDDEN, OUT_PAD)), resident((1, OUT_PAD)),  # w5, b5 (padded)
    ]
    out_spec = pl.BlockSpec((tb, OUT_PAD), lambda i: (i, 0))

    weight_bytes = sum(int(p.size) * p.dtype.itemsize for p in prepared_params)
    io_tile_bytes = tb * (2 + 1 + OUT_PAD) * 4
    act_bytes = 8 * tb * HIDDEN * 4          # headroom for f32/bf16 activations
    budget = weight_bytes + 2 * 2 * io_tile_bytes + act_bytes
    # Clamp well under v7x's 64 MiB physical VMEM (v5e/v6e have 128 MiB).
    vmem_limit = int(min(max(budget, 32 << 20), 48 << 20))

    flops = 2 * B * (3 * HIDDEN + 3 * HIDDEN * HIDDEN + HIDDEN * 2)
    bytes_accessed = (B * (2 + 1) * 4            # x + t reads
                      + weight_bytes             # resident weights (once)
                      + B * OUT_PAD * 4)         # padded output write

    out_padded = pl.pallas_call(
        flownet_mlp_kernel,
        grid=grid,
        in_specs=in_specs,
        out_specs=out_spec,
        out_shape=jax.ShapeDtypeStruct((B, OUT_PAD), jnp.float32),
        compiler_params=pltpu.CompilerParams(
            dimension_semantics=("parallel",),
            vmem_limit_bytes=vmem_limit,
        ),
        cost_estimate=pl.CostEstimate(
            flops=flops, transcendentals=0, bytes_accessed=bytes_accessed),
    )(x, t_col, *prepared_params)

    return out_padded[:, :2]


# ---------------------------------------------------------------------------
# Pure-JAX references.
# ---------------------------------------------------------------------------
def flownet_reference(x, t, params, *, matmul_dtype=jnp.float32):
    B = x.shape[0]
    t_col = jnp.broadcast_to(jnp.reshape(t, (-1, 1)), (B, 1)).astype(x.dtype)
    h = jnp.concatenate([x, t_col], axis=1)
    n = len(params)
    for i, (w, b) in enumerate(params):
        if i == 0 or matmul_dtype == jnp.float32:
            h = jnp.dot(h, w, preferred_element_type=jnp.float32) + b
        else:
            h = jnp.dot(h.astype(matmul_dtype), w.astype(matmul_dtype),
                        preferred_element_type=jnp.float32) + b
        if i < n - 1:
            h = jnp.maximum(h, 0.0)
    return h


if __name__ == "__main__":
    key = jax.random.PRNGKey(0)
    k_params, k_x, k_t, k_x2 = jax.random.split(key, 4)

    raw_params = init_flownet_params(k_params)
    params = prepare_flownet_params(raw_params)

    # Case 1: small batch, scalar t (matches torch t.expand(B, 1)).
    # tb is capped at 32 here so the grid still has 2 ("parallel") steps.
    B = 64
    x = jax.random.normal(k_x, (B, 2), dtype=jnp.float32)
    t = jax.random.uniform(k_t, (1, 1), dtype=jnp.float32)

    out = jax.block_until_ready(flownet_forward(x, t, params))
    assert out.shape == (B, 2), out.shape

    ref_matched = flownet_reference(x, t, raw_params, matmul_dtype=jnp.bfloat16)
    ref_f32 = flownet_reference(x, t, raw_params)
    assert jnp.allclose(out, ref_matched, atol=1e-3, rtol=1e-3), "mismatch vs bf16 ref"
    assert jnp.allclose(out, ref_f32, atol=5e-2, rtol=5e-2), "mismatch vs f32 ref"

    # Case 2: multi-step batch grid (resident weights reused) with per-sample t.
    B2 = 256
    x2 = jax.random.normal(k_x2, (B2, 2), dtype=jnp.float32)
    t2 = jnp.linspace(0.0, 1.0, B2, dtype=jnp.float32).reshape(B2, 1)

    out2 = jax.block_until_ready(flownet_forward(x2, t2, params, tile_b=128))
    ref2 = flownet_reference(x2, t2, raw_params, matmul_dtype=jnp.bfloat16)
    assert out2.shape == (B2, 2), out2.shape
    assert jnp.allclose(out2, ref2, atol=1e-3, rtol=1e-3), "mismatch vs ref (grid)"

    print("KERNEL_OK")
</pallas_src>

<mosaic_0001>
module attributes {stable_mosaic.version = 11 : i64} {
  func.func @flownet_mlp_kernel(%arg0: i32, %arg1: memref<32x2xf32, #tpu.memory_space<vmem>>, %arg2: memref<32x1xf32, #tpu.memory_space<vmem>>, %arg3: memref<8x128xf32, #tpu.memory_space<vmem>>, %arg4: memref<1x128xf32, #tpu.memory_space<vmem>>, %arg5: memref<128x128xbf16, #tpu.memory_space<vmem>>, %arg6: memref<1x128xf32, #tpu.memory_space<vmem>>, %arg7: memref<128x128xbf16, #tpu.memory_space<vmem>>, %arg8: memref<1x128xf32, #tpu.memory_space<vmem>>, %arg9: memref<128x128xbf16, #tpu.memory_space<vmem>>, %arg10: memref<1x128xf32, #tpu.memory_space<vmem>>, %arg11: memref<128x8xbf16, #tpu.memory_space<vmem>>, %arg12: memref<1x8xf32, #tpu.memory_space<vmem>>, %arg13: memref<32x8xf32, #tpu.memory_space<vmem>>) attributes {dimension_semantics = [#tpu.dimension_semantics<parallel>], iteration_bounds = array<i64: 2>, scalar_prefetch = 0 : i64, scratch_operands = 0 : i64, tpu.core_type = #tpu.core_type<tc>, window_params = [{transform_indices = @transform_0, window_bounds = array<i64: 32, 2>}, {transform_indices = @transform_1, window_bounds = array<i64: 32, 1>}, {pipeline_mode = #tpu.pipeline_mode<synchronous>, transform_indices = @transform_2, window_bounds = array<i64: 8, 128>}, {pipeline_mode = #tpu.pipeline_mode<synchronous>, transform_indices = @transform_3, window_bounds = array<i64: 1, 128>}, {pipeline_mode = #tpu.pipeline_mode<synchronous>, transform_indices = @transform_4, window_bounds = array<i64: 128, 128>}, {pipeline_mode = #tpu.pipeline_mode<synchronous>, transform_indices = @transform_5, window_bounds = array<i64: 1, 128>}, {pipeline_mode = #tpu.pipeline_mode<synchronous>, transform_indices = @transform_6, window_bounds = array<i64: 128, 128>}, {pipeline_mode = #tpu.pipeline_mode<synchronous>, transform_indices = @transform_7, window_bounds = array<i64: 1, 128>}, {pipeline_mode = #tpu.pipeline_mode<synchronous>, transform_indices = @transform_8, window_bounds = array<i64: 128, 128>}, {pipeline_mode = #tpu.pipeline_mode<synchronous>, transform_indices = @transform_9, window_bounds = array<i64: 1, 128>}, {pipeline_mode = #tpu.pipeline_mode<synchronous>, transform_indices = @transform_10, window_bounds = array<i64: 128, 8>}, {pipeline_mode = #tpu.pipeline_mode<synchronous>, transform_indices = @transform_11, window_bounds = array<i64: 1, 8>}, {transform_indices = @transform_12, window_bounds = array<i64: 32, 8>}]} {
    %c0 = arith.constant 0 : index
    %c0_0 = arith.constant 0 : index
    %0 = vector.load %arg1[%c0, %c0_0] : memref<32x2xf32, #tpu.memory_space<vmem>>, vector<32x2xf32>
    %c0_1 = arith.constant 0 : index
    %c0_2 = arith.constant 0 : index
    %1 = vector.load %arg2[%c0_1, %c0_2] : memref<32x1xf32, #tpu.memory_space<vmem>>, vector<32x1xf32>
    %c0_3 = arith.constant 0 : index
    %c0_4 = arith.constant 0 : index
    %2 = vector.load %arg3[%c0_3, %c0_4] : memref<8x128xf32, #tpu.memory_space<vmem>>, vector<8x128xf32>
    %3 = vector.extract_strided_slice %0 {offsets = [0, 0], sizes = [32, 1], strides = [1, 1]} : vector<32x2xf32> to vector<32x1xf32>
    %4 = vector.extract_strided_slice %2 {offsets = [0, 0], sizes = [1, 128], strides = [1, 1]} : vector<8x128xf32> to vector<1x128xf32>
    %5 = vector.broadcast %3 : vector<32x1xf32> to vector<32x128xf32>
    %6 = vector.broadcast %4 : vector<1x128xf32> to vector<32x128xf32>
    %7 = arith.mulf %5, %6 : vector<32x128xf32>
    %8 = vector.extract_strided_slice %0 {offsets = [0, 1], sizes = [32, 1], strides = [1, 1]} : vector<32x2xf32> to vector<32x1xf32>
    %9 = vector.extract_strided_slice %2 {offsets = [1, 0], sizes = [1, 128], strides = [1, 1]} : vector<8x128xf32> to vector<1x128xf32>
    %10 = vector.broadcast %8 : vector<32x1xf32> to vector<32x128xf32>
    %11 = vector.broadcast %9 : vector<1x128xf32> to vector<32x128xf32>
    %12 = arith.mulf %10, %11 : vector<32x128xf32>
    %13 = arith.addf %7, %12 : vector<32x128xf32>
    %14 = vector.extract_strided_slice %2 {offsets = [2, 0], sizes = [1, 128], strides = [1, 1]} : vector<8x128xf32> to vector<1x128xf32>
    %15 = vector.broadcast %1 : vector<32x1xf32> to vector<32x128xf32>
    %16 = vector.broadcast %14 : vector<1x128xf32> to vector<32x128xf32>
    %17 = arith.mulf %15, %16 : vector<32x128xf32>
    %18 = arith.addf %13, %17 : vector<32x128xf32>
    %c0_5 = arith.constant 0 : index
    %c0_6 = arith.constant 0 : index
    %19 = vector.load %arg4[%c0_5, %c0_6] : memref<1x128xf32, #tpu.memory_space<vmem>>, vector<1x128xf32>
    %20 = vector.broadcast %19 : vector<1x128xf32> to vector<32x128xf32>
    %21 = arith.addf %18, %20 : vector<32x128xf32>
    %cst = arith.constant 0.000000e+00 : f32
    %22 = vector.broadcast %cst : f32 to vector<32x128xf32>
    %23 = arith.maximumf %21, %22 : vector<32x128xf32>
    %24 = arith.truncf %23 : vector<32x128xf32> to vector<32x128xbf16>
    %c0_7 = arith.constant 0 : index
    %c0_8 = arith.constant 0 : index
    %25 = vector.load %arg5[%c0_7, %c0_8] : memref<128x128xbf16, #tpu.memory_space<vmem>>, vector<128x128xbf16>
    %cst_9 = arith.constant dense<0.000000e+00> : vector<32x128xf32>
    %26 = tpu.matmul %24, %25, %cst_9 {dimension_numbers = #tpu.dot_dimension_numbers<[1], [0], [0], [1], [0, 0, 1, 1], [], []>} : vector<32x128xbf16>, vector<128x128xbf16>, vector<32x128xf32> -> vector<32x128xf32>
    %c0_10 = arith.constant 0 : index
    %c0_11 = arith.constant 0 : index
    %27 = vector.load %arg6[%c0_10, %c0_11] : memref<1x128xf32, #tpu.memory_space<vmem>>, vector<1x128xf32>
    %28 = vector.broadcast %27 : vector<1x128xf32> to vector<32x128xf32>
    %29 = arith.addf %26, %28 : vector<32x128xf32>
    %cst_12 = arith.constant 0.000000e+00 : f32
    %30 = vector.broadcast %cst_12 : f32 to vector<32x128xf32>
    %31 = arith.maximumf %29, %30 : vector<32x128xf32>
    %32 = arith.truncf %31 : vector<32x128xf32> to vector<32x128xbf16>
    %c0_13 = arith.constant 0 : index
    %c0_14 = arith.constant 0 : index
    %33 = vector.load %arg7[%c0_13, %c0_14] : memref<128x128xbf16, #tpu.memory_space<vmem>>, vector<128x128xbf16>
    %cst_15 = arith.constant dense<0.000000e+00> : vector<32x128xf32>
    %34 = tpu.matmul %32, %33, %cst_15 {dimension_numbers = #tpu.dot_dimension_numbers<[1], [0], [0], [1], [0, 0, 1, 1], [], []>} : vector<32x128xbf16>, vector<128x128xbf16>, vector<32x128xf32> -> vector<32x128xf32>
    %c0_16 = arith.constant 0 : index
    %c0_17 = arith.constant 0 : index
    %35 = vector.load %arg8[%c0_16, %c0_17] : memref<1x128xf32, #tpu.memory_space<vmem>>, vector<1x128xf32>
    %36 = vector.broadcast %35 : vector<1x128xf32> to vector<32x128xf32>
    %37 = arith.addf %34, %36 : vector<32x128xf32>
    %cst_18 = arith.constant 0.000000e+00 : f32
    %38 = vector.broadcast %cst_18 : f32 to vector<32x128xf32>
    %39 = arith.maximumf %37, %38 : vector<32x128xf32>
    %40 = arith.truncf %39 : vector<32x128xf32> to vector<32x128xbf16>
    %c0_19 = arith.constant 0 : index
    %c0_20 = arith.constant 0 : index
    %41 = vector.load %arg9[%c0_19, %c0_20] : memref<128x128xbf16, #tpu.memory_space<vmem>>, vector<128x128xbf16>
    %cst_21 = arith.constant dense<0.000000e+00> : vector<32x128xf32>
    %42 = tpu.matmul %40, %41, %cst_21 {dimension_numbers = #tpu.dot_dimension_numbers<[1], [0], [0], [1], [0, 0, 1, 1], [], []>} : vector<32x128xbf16>, vector<128x128xbf16>, vector<32x128xf32> -> vector<32x128xf32>
    %c0_22 = arith.constant 0 : index
    %c0_23 = arith.constant 0 : index
    %43 = vector.load %arg10[%c0_22, %c0_23] : memref<1x128xf32, #tpu.memory_space<vmem>>, vector<1x128xf32>
    %44 = vector.broadcast %43 : vector<1x128xf32> to vector<32x128xf32>
    %45 = arith.addf %42, %44 : vector<32x128xf32>
    %cst_24 = arith.constant 0.000000e+00 : f32
    %46 = vector.broadcast %cst_24 : f32 to vector<32x128xf32>
    %47 = arith.maximumf %45, %46 : vector<32x128xf32>
    %48 = arith.truncf %47 : vector<32x128xf32> to vector<32x128xbf16>
    %c0_25 = arith.constant 0 : index
    %c0_26 = arith.constant 0 : index
    %49 = vector.load %arg11[%c0_25, %c0_26] : memref<128x8xbf16, #tpu.memory_space<vmem>>, vector<128x8xbf16>
    %cst_27 = arith.constant dense<0.000000e+00> : vector<32x8xf32>
    %50 = tpu.matmul %48, %49, %cst_27 {dimension_numbers = #tpu.dot_dimension_numbers<[1], [0], [0], [1], [0, 0, 1, 1], [], []>} : vector<32x128xbf16>, vector<128x8xbf16>, vector<32x8xf32> -> vector<32x8xf32>
    %c0_28 = arith.constant 0 : index
    %c0_29 = arith.constant 0 : index
    %51 = vector.load %arg12[%c0_28, %c0_29] : memref<1x8xf32, #tpu.memory_space<vmem>>, vector<1x8xf32>
    %52 = vector.broadcast %51 : vector<1x8xf32> to vector<32x8xf32>
    %53 = arith.addf %50, %52 : vector<32x8xf32>
    %c0_30 = arith.constant 0 : index
    %c0_31 = arith.constant 0 : index
    %54 = vector.load %arg13[%c0_30, %c0_31] : memref<32x8xf32, #tpu.memory_space<vmem>>, vector<32x8xf32>
    tpu.vector_store %arg13[%c0_30, %c0_31], %53 {strides = array<i32>} : memref<32x8xf32, #tpu.memory_space<vmem>>, vector<32x8xf32>,
    return
  }
  func.func @transform_0(%arg0: i32) -> (i32, i32) {
    %c0_i32 = arith.constant 0 : i32
    %c0_i32_0 = arith.constant 0 : i32
    return %arg0, %c0_i32 : i32, i32
  }
  func.func @transform_1(%arg0: i32) -> (i32, i32) {
    %c0_i32 = arith.constant 0 : i32
    %c0_i32_0 = arith.constant 0 : i32
    return %arg0, %c0_i32 : i32, i32
  }
  func.func @transform_2(%arg0: i32) -> (i32, i32) {
    %c0_i32 = arith.constant 0 : i32
    %c0_i32_0 = arith.constant 0 : i32
    %c0_i32_1 = arith.constant 0 : i32
    return %c0_i32, %c0_i32_0 : i32, i32
  }
  func.func @transform_3(%arg0: i32) -> (i32, i32) {
    %c0_i32 = arith.constant 0 : i32
    %c0_i32_0 = arith.constant 0 : i32
    %c0_i32_1 = arith.constant 0 : i32
    return %c0_i32, %c0_i32_0 : i32, i32
  }
  func.func @transform_4(%arg0: i32) -> (i32, i32) {
    %c0_i32 = arith.constant 0 : i32
    %c0_i32_0 = arith.constant 0 : i32
    %c0_i32_1 = arith.constant 0 : i32
    return %c0_i32, %c0_i32_0 : i32, i32
  }
  func.func @transform_5(%arg0: i32) -> (i32, i32) {
    %c0_i32 = arith.constant 0 : i32
    %c0_i32_0 = arith.constant 0 : i32
    %c0_i32_1 = arith.constant 0 : i32
    return %c0_i32, %c0_i32_0 : i32, i32
  }
  func.func @transform_6(%arg0: i32) -> (i32, i32) {
    %c0_i32 = arith.constant 0 : i32
    %c0_i32_0 = arith.constant 0 : i32
    %c0_i32_1 = arith.constant 0 : i32
    return %c0_i32, %c0_i32_0 : i32, i32
  }
  func.func @transform_7(%arg0: i32) -> (i32, i32) {
    %c0_i32 = arith.constant 0 : i32
    %c0_i32_0 = arith.constant 0 : i32
    %c0_i32_1 = arith.constant 0 : i32
    return %c0_i32, %c0_i32_0 : i32, i32
  }
  func.func @transform_8(%arg0: i32) -> (i32, i32) {
    %c0_i32 = arith.constant 0 : i32
    %c0_i32_0 = arith.constant 0 : i32
    %c0_i32_1 = arith.constant 0 : i32
    return %c0_i32, %c0_i32_0 : i32, i32
  }
  func.func @transform_9(%arg0: i32) -> (i32, i32) {
    %c0_i32 = arith.constant 0 : i32
    %c0_i32_0 = arith.constant 0 : i32
    %c0_i32_1 = arith.constant 0 : i32
    return %c0_i32, %c0_i32_0 : i32, i32
  }
  func.func @transform_10(%arg0: i32) -> (i32, i32) {
    %c0_i32 = arith.constant 0 : i32
    %c0_i32_0 = arith.constant 0 : i32
    %c0_i32_1 = arith.constant 0 : i32
    return %c0_i32, %c0_i32_0 : i32, i32
  }
  func.func @transform_11(%arg0: i32) -> (i32, i32) {
    %c0_i32 = arith.constant 0 : i32
    %c0_i32_0 = arith.constant 0 : i32
    %c0_i32_1 = arith.constant 0 : i32
    return %c0_i32, %c0_i32_0 : i32, i32
  }
  func.func @transform_12(%arg0: i32) -> (i32, i32) {
    %c0_i32 = arith.constant 0 : i32
    %c0_i32_0 = arith.constant 0 : i32
    return %arg0, %c0_i32 : i32, i32
  }
}

</mosaic_0001>

<llo_original>
// kernel: tpu_custom_call.1
$region0: #{tpu_custom_call.1}
  #allocation0 [shape = 'u32[]', space=smem, size = 0x4, offset = 0x4, fixed_abs, tag = 'smem constant byte address 0x4 - core index']
  #allocation1 [shape = 'u32[144,128]{1,0:T(1,128)}', space=vmem, size = 0x12000, scoped, tag = 'internal scratch']
  %s0 = inlined_call_operand.vmem [shape: f32[64,2], index: 0, kind: input, shape index: {}]
  %s1 = inlined_call_operand.vmem [shape: f32[64,1], index: 1, kind: input, shape index: {}]
  %s2 = inlined_call_operand.vmem [shape: f32[8,128], index: 2, kind: input, shape index: {}]
  %s3 = inlined_call_operand.hbm [shape: f32[1,128], index: 3, kind: input, shape index: {}]
  %s4 = inlined_call_operand.vmem [shape: bf16[128,128], index: 4, kind: input, shape index: {}]
  %s5 = inlined_call_operand.vmem [shape: f32[1,128], index: 5, kind: input, shape index: {}]
  %s6 = inlined_call_operand.vmem [shape: bf16[128,128], index: 6, kind: input, shape index: {}]
  %s7 = inlined_call_operand.vmem [shape: f32[1,128], index: 7, kind: input, shape index: {}]
  %s8 = inlined_call_operand.vmem [shape: bf16[128,128], index: 8, kind: input, shape index: {}]
  %s9 = inlined_call_operand.vmem [shape: f32[1,128], index: 9, kind: input, shape index: {}]
  %s10 = inlined_call_operand.vmem [shape: bf16[128,8], index: 10, kind: input, shape index: {}]
  %s11 = inlined_call_operand.vmem [shape: f32[1,8], index: 11, kind: input, shape index: {}]
  %s12 = inlined_call_operand.vmem [shape: f32[64,8], index: 12, kind: output, shape index: {}]
  %s13 = sld [smem:[#allocation0]]
  $region85: #{tpu_custom_call.1} parent=0
    _
  %s15 = ssub.s32 1, %s13
  %s16 = scalar_select 0, %s15, %s13
  $region1: #{tpu_custom_call.1} parent=0
    #allocation2 [shape = 'u8[512]{0}', space=vmem, size = 0x400, scoped, tag = 'input window, operand 3, single buffered']
    #allocation3 [shape = 's32[2]{0}', space=sflag, size = 0x8, scoped, tag = 'scoped memory for tpu_custom_call.1']
    %17 = vsyncpa [#allocation3], 0
    loop: start=0, step=1, limit=4
    $region2: #{tpu_custom_call.1} parent=1 // loop_pre_header
      _
    $region3: #{tpu_custom_call.1} parent=1 // loop_header
      %s19 = sphi 0, %s23
      %p20 = scmp.ge.s32.totalorder %s19, 4
      %s29 = sphi 0, %s31
      %s32 = sphi 0, %s29
      %s33 = sphi 0, %s32
      %s49 = sphi 0, %s33
      %s55 = sphi 0, %s57
      %s58 = sphi 0, %s55
      %s59 = sphi 0, %s58
      %s75 = sphi 0, %s59
      %s79 = sphi 0, %s79
      %s81 = sphi 0, %s79
      %s82 = sphi 0, %s81
      %s96 = sphi 0, %s82
      %s100 = sphi 0, %s100
      %s102 = sphi 0, %s100
      %s103 = sphi 0, %s102
      %s117 = sphi 0, %s103
      %s121 = sphi 0, %s121
      %s123 = sphi 0, %s121
      %s124 = sphi 0, %s123
      %s138 = sphi 0, %s124
      %s142 = sphi 0, %s142
      %s144 = sphi 0, %s142
      %s145 = sphi 0, %s144
      %s159 = sphi 0, %s145
      %s163 = sphi 0, %s163
      %s165 = sphi 0, %s163
      %s166 = sphi 0, %s165
      %s180 = sphi 0, %s166
      %s184 = sphi 0, %s184
      %s186 = sphi 0, %s184
      %s187 = sphi 0, %s186
      %s201 = sphi 0, %s187
      %s205 = sphi 0, %s205
      %s207 = sphi 0, %s205
      %s208 = sphi 0, %s207
      %s222 = sphi 0, %s208
      %s226 = sphi 0, %s226
      %s228 = sphi 0, %s226
      %s229 = sphi 0, %s228
      %s243 = sphi 0, %s229
      %s247 = sphi 0, %s247
      %s249 = sphi 0, %s247
      %s250 = sphi 0, %s249
      %s264 = sphi 0, %s250
      %s268 = sphi 0, %s268
      %s270 = sphi 0, %s268
      %s271 = sphi 0, %s270
      %s285 = sphi 0, %s271
      %s291 = sphi 0, %s293
      %s294 = sphi 0, %s291
      %s295 = sphi 0, %s294
      %s311 = sphi 0, %s295
    $region4: #{tpu_custom_call.1} parent=1 // loop_header_branch
      %22 = sbr.rel (%p20) target = $region8
    $region5: #{tpu_custom_call.1} parent=1 // loop_body
      %s24 = ssub.s32 %s19, 1
      %s25 = ssub.s32 %s19, 2
      %s26 = sadd.s32 %s19, 1
      %s27 = ssub.s32 %s19, %s26
      %p28 = scmp.eq.s32.totalorder %s27, 0
      %s30 = sadd.s32 %s29, 1
      %s31 = scalar_select %p28, %s29, %s30
      %p34 = pneg %p28
      %p35 = scmp.eq.s32.totalorder %s19, 1
      %p36 = por %p34, %p35
      %p37 = scmp.ne.s32.totalorder %s29, %s32
      %p38 = scmp.eq.s32.totalorder %s19, 0
      %p39 = por %p37, %p38
      %p40 = scmp.ne.s32.totalorder %s29, %s32
      %p41 = scmp.eq.s32.totalorder %s24, 1
      %p42 = por %p40, %p41
      %p43 = scmp.ne.s32.totalorder %s32, %s33
      %p44 = scmp.eq.s32.totalorder %s24, 0
      %p45 = por %p43, %p44
      %p46 = scmp.ne.s32.totalorder %s32, %s33
      %p47 = scmp.eq.s32.totalorder %s25, 1
      %p48 = por %p46, %p47
      %p50 = scmp.ne.s32.totalorder %s33, %s49
      %p51 = scmp.eq.s32.totalorder %s25, 0
      %p52 = por %p50, %p51
      %s53 = ssub.s32 %s19, %s26
      %p54 = scmp.eq.s32.totalorder %s53, 0
      %s56 = sadd.s32 %s55, 1
      %s57 = scalar_select %p54, %s55, %s56
      %p60 = pneg %p54
      %p61 = scmp.eq.s32.totalorder %s19, 1
      %p62 = por %p60, %p61
      %p63 = scmp.ne.s32.totalorder %s55, %s58
      %p64 = scmp.eq.s32.totalorder %s19, 0
      %p65 = por %p63, %p64
      %p66 = scmp.ne.s32.totalorder %s55, %s58
      %p67 = scmp.eq.s32.totalorder %s24, 1
      %p68 = por %p66, %p67
      %p69 = scmp.ne.s32.totalorder %s58, %s59
      %p70 = scmp.eq.s32.totalorder %s24, 0
      %p71 = por %p69, %p70
      %p72 = scmp.ne.s32.totalorder %s58, %s59
      %p73 = scmp.eq.s32.totalorder %s25, 1
      %p74 = por %p72, %p73
      %p76 = scmp.ne.s32.totalorder %s59, %s75
      %p77 = scmp.eq.s32.totalorder %s25, 0
      %p78 = por %p76, %p77
      %s80 = sadd.s32 %s79, 1
      %p83 = scmp.eq.s32.totalorder %s19, 1
      %p84 = scmp.ne.s32.totalorder %s79, %s81
      %p85 = scmp.eq.s32.totalorder %s19, 0
      %p86 = por %p84, %p85
      %p87 = scmp.ne.s32.totalorder %s79, %s81
      %p88 = scmp.eq.s32.totalorder %s24, 1
      %p89 = por %p87, %p88
      %p90 = scmp.ne.s32.totalorder %s81, %s82
      %p91 = scmp.eq.s32.totalorder %s24, 0
      %p92 = por %p90, %p91
      %p93 = scmp.ne.s32.totalorder %s81, %s82
      %p94 = scmp.eq.s32.totalorder %s25, 1
      %p95 = por %p93, %p94
      %p97 = scmp.ne.s32.totalorder %s82, %s96
      %p98 = scmp.eq.s32.totalorder %s25, 0
      %p99 = por %p97, %p98
      %s101 = sadd.s32 %s100, 1
      %p104 = scmp.eq.s32.totalorder %s19, 1
      %p105 = scmp.ne.s32.totalorder %s100, %s102
      %p106 = scmp.eq.s32.totalorder %s19, 0
      %p107 = por %p105, %p106
      %p108 = scmp.ne.s32.totalorder %s100, %s102
      %p109 = scmp.eq.s32.totalorder %s24, 1
      %p110 = por %p108, %p109
      %p111 = scmp.ne.s32.totalorder %s102, %s103
      %p112 = scmp.eq.s32.totalorder %s24, 0
      %p113 = por %p111, %p112
      %p114 = scmp.ne.s32.totalorder %s102, %s103
      %p115 = scmp.eq.s32.totalorder %s25, 1
      %p116 = por %p114, %p115
      %p118 = scmp.ne.s32.totalorder %s103, %s117
      %p119 = scmp.eq.s32.totalorder %s25, 0
      %p120 = por %p118, %p119
      %s122 = sadd.s32 %s121, 1
      %p125 = scmp.eq.s32.totalorder %s19, 1
      %p126 = scmp.ne.s32.totalorder %s121, %s123
      %p127 = scmp.eq.s32.totalorder %s19, 0
      %p128 = por %p126, %p127
      %p129 = scmp.ne.s32.totalorder %s121, %s123
      %p130 = scmp.eq.s32.totalorder %s24, 1
      %p131 = por %p129, %p130
      %p132 = scmp.ne.s32.totalorder %s123, %s124
      %p133 = scmp.eq.s32.totalorder %s24, 0
      %p134 = por %p132, %p133
      %p135 = scmp.ne.s32.totalorder %s123, %s124
      %p136 = scmp.eq.s32.totalorder %s25, 1
      %p137 = por %p135, %p136
      %p139 = scmp.ne.s32.totalorder %s124, %s138
      %p140 = scmp.eq.s32.totalorder %s25, 0
      %p141 = por %p139, %p140
      %s143 = sadd.s32 %s142, 1
      %p146 = scmp.eq.s32.totalorder %s19, 1
      %p147 = scmp.ne.s32.totalorder %s142, %s144
      %p148 = scmp.eq.s32.totalorder %s19, 0
      %p149 = por %p147, %p148
      %p150 = scmp.ne.s32.totalorder %s142, %s144
      %p151 = scmp.eq.s32.totalorder %s24, 1
      %p152 = por %p150, %p151
      %p153 = scmp.ne.s32.totalorder %s144, %s145
      %p154 = scmp.eq.s32.totalorder %s24, 0
      %p155 = por %p153, %p154
      %p156 = scmp.ne.s32.totalorder %s144, %s145
      %p157 = scmp.eq.s32.totalorder %s25, 1
      %p158 = por %p156, %p157
      %p160 = scmp.ne.s32.totalorder %s145, %s159
      %p161 = scmp.eq.s32.totalorder %s25, 0
      %p162 = por %p160, %p161
      %s164 = sadd.s32 %s163, 1
      %p167 = scmp.eq.s32.totalorder %s19, 1
      %p168 = scmp.ne.s32.totalorder %s163, %s165
      %p169 = scmp.eq.s32.totalorder %s19, 0
      %p170 = por %p168, %p169
      %p171 = scmp.ne.s32.totalorder %s163, %s165
      %p172 = scmp.eq.s32.totalorder %s24, 1
      %p173 = por %p171, %p172
      %p174 = scmp.ne.s32.totalorder %s165, %s166
      %p175 = scmp.eq.s32.totalorder %s24, 0
      %p176 = por %p174, %p175
      %p177 = scmp.ne.s32.totalorder %s165, %s166
      %p178 = scmp.eq.s32.totalorder %s25, 1
      %p179 = por %p177, %p178
      %p181 = scmp.ne.s32.totalorder %s166, %s180
      %p182 = scmp.eq.s32.totalorder %s25, 0
      %p183 = por %p181, %p182
      %s185 = sadd.s32 %s184, 1
      %p188 = scmp.eq.s32.totalorder %s19, 1
      %p189 = scmp.ne.s32.totalorder %s184, %s186
      %p190 = scmp.eq.s32.totalorder %s19, 0
      %p191 = por %p189, %p190
      %p192 = scmp.ne.s32.totalorder %s184, %s186
      %p193 = scmp.eq.s32.totalorder %s24, 1
      %p194 = por %p192, %p193
      %p195 = scmp.ne.s32.totalorder %s186, %s187
      %p196 = scmp.eq.s32.totalorder %s24, 0
      %p197 = por %p195, %p196
      %p198 = scmp.ne.s32.totalorder %s186, %s187
      %p199 = scmp.eq.s32.totalorder %s25, 1
      %p200 = por %p198, %p199
      %p202 = scmp.ne.s32.totalorder %s187, %s201
      %p203 = scmp.eq.s32.totalorder %s25, 0
      %p204 = por %p202, %p203
      %s206 = sadd.s32 %s205, 1
      %p209 = scmp.eq.s32.totalorder %s19, 1
      %p210 = scmp.ne.s32.totalorder %s205, %s207
      %p211 = scmp.eq.s32.totalorder %s19, 0
      %p212 = por %p210, %p211
      %p213 = scmp.ne.s32.totalorder %s205, %s207
      %p214 = scmp.eq.s32.totalorder %s24, 1
      %p215 = por %p213, %p214
      %p216 = scmp.ne.s32.totalorder %s207, %s208
      %p217 = scmp.eq.s32.totalorder %s24, 0
      %p218 = por %p216, %p217
      %p219 = scmp.ne.s32.totalorder %s207, %s208
      %p220 = scmp.eq.s32.totalorder %s25, 1
      %p221 = por %p219, %p220
      %p223 = scmp.ne.s32.totalorder %s208, %s222
      %p224 = scmp.eq.s32.totalorder %s25, 0
      %p225 = por %p223, %p224
      %s227 = sadd.s32 %s226, 1
      %p230 = scmp.eq.s32.totalorder %s19, 1
      %p231 = scmp.ne.s32.totalorder %s226, %s228
      %p232 = scmp.eq.s32.totalorder %s19, 0
      %p233 = por %p231, %p232
      %p234 = scmp.ne.s32.totalorder %s226, %s228
      %p235 = scmp.eq.s32.totalorder %s24, 1
      %p236 = por %p234, %p235
      %p237 = scmp.ne.s32.totalorder %s228, %s229
      %p238 = scmp.eq.s32.totalorder %s24, 0
      %p239 = por %p237, %p238
      %p240 = scmp.ne.s32.totalorder %s228, %s229
      %p241 = scmp.eq.s32.totalorder %s25, 1
      %p242 = por %p240, %p241
      %p244 = scmp.ne.s32.totalorder %s229, %s243
      %p245 = scmp.eq.s32.totalorder %s25, 0
      %p246 = por %p244, %p245
      %s248 = sadd.s32 %s247, 1
      %p251 = scmp.eq.s32.totalorder %s19, 1
      %p252 = scmp.ne.s32.totalorder %s247, %s249
      %p253 = scmp.eq.s32.totalorder %s19, 0
      %p254 = por %p252, %p253
      %p255 = scmp.ne.s32.totalorder %s247, %s249
      %p256 = scmp.eq.s32.totalorder %s24, 1
      %p257 = por %p255, %p256
      %p258 = scmp.ne.s32.totalorder %s249, %s250
      %p259 = scmp.eq.s32.totalorder %s24, 0
      %p260 = por %p258, %p259
      %p261 = scmp.ne.s32.totalorder %s249, %s250
      %p262 = scmp.eq.s32.totalorder %s25, 1
      %p263 = por %p261, %p262
      %p265 = scmp.ne.s32.totalorder %s250, %s264
      %p266 = scmp.eq.s32.totalorder %s25, 0
      %p267 = por %p265, %p266
      %s269 = sadd.s32 %s268, 1
      %p272 = scmp.eq.s32.totalorder %s19, 1
      %p273 = scmp.ne.s32.totalorder %s268, %s270
      %p274 = scmp.eq.s32.totalorder %s19, 0
      %p275 = por %p273, %p274
      %p276 = scmp.ne.s32.totalorder %s268, %s270
      %p277 = scmp.eq.s32.totalorder %s24, 1
      %p278 = por %p276, %p277
      %p279 = scmp.ne.s32.totalorder %s270, %s271
      %p280 = scmp.eq.s32.totalorder %s24, 0
      %p281 = por %p279, %p280
      %p282 = scmp.ne.s32.totalorder %s270, %s271
      %p283 = scmp.eq.s32.totalorder %s25, 1
      %p284 = por %p282, %p283
      %p286 = scmp.ne.s32.totalorder %s271, %s285
      %p287 = scmp.eq.s32.totalorder %s25, 0
      %p288 = por %p286, %p287
      %s289 = ssub.s32 %s19, %s26
      %p290 = scmp.eq.s32.totalorder %s289, 0
      %s292 = sadd.s32 %s291, 1
      %s293 = scalar_select %p290, %s291, %s292
      %p296 = pneg %p290
      %p297 = scmp.eq.s32.totalorder %s19, 1
      %p298 = por %p296, %p297
      %p299 = scmp.ne.s32.totalorder %s291, %s294
      %p300 = scmp.eq.s32.totalorder %s19, 0
      %p301 = por %p299, %p300
      %p302 = scmp.ne.s32.totalorder %s291, %s294
      %p303 = scmp.eq.s32.totalorder %s24, 1
      %p304 = por %p302, %p303
      %p305 = scmp.ne.s32.totalorder %s294, %s295
      %p306 = scmp.eq.s32.totalorder %s24, 0
      %p307 = por %p305, %p306
      %p308 = scmp.ne.s32.totalorder %s294, %s295
      %p309 = scmp.eq.s32.totalorder %s25, 1
      %p310 = por %p308, %p309
      %p312 = scmp.ne.s32.totalorder %s295, %s311
      %p313 = scmp.eq.s32.totalorder %s25, 0
      %p314 = por %p312, %p313
      %p315 = scmp.le.s32.totalorder 1, %s19
      %p316 = scmp.lt.s32.totalorder %s19, 3
      %p317 = pnand %p315, %p316
      %p318 = pneg %p317
      // Predicated region
      $region9: #{tpu_custom_call.1} parent=5 // pred_check
        _
      $region10: #{tpu_custom_call.1} parent=5 // pred_check_branch
        %320 = sbr.rel (%p317) target = $region12
      $region11: #{tpu_custom_call.1} parent=5 // pred_region
        %s321 = ssub.s32 %s19, 1
        // Predicated region
        $region13: #{tpu_custom_call.1} parent=11 // pred_check
          %p322 = pneg %p92
        $region14: #{tpu_custom_call.1} parent=11 // pred_check_branch
          %324 = sbr.rel (%p322) target = $region16
        $region15: #{tpu_custom_call.1} parent=11 // pred_region
          _
        $region16: #{tpu_custom_call.1} parent=11 // pred_fallthru
          _
        // Predicated region
        $region17: #{tpu_custom_call.1} parent=11 // pred_check
          %p325 = pneg %p113
        $region18: #{tpu_custom_call.1} parent=11 // pred_check_branch
          %327 = sbr.rel (%p325) target = $region20
        $region19: #{tpu_custom_call.1} parent=11 // pred_region
          %s329 = ssub.s32 16, 16
          %330 = vsyncadd [#allocation3], %s329
          %s332 = sshll.u32 [#allocation2], 4
          %s333 = int_to_ptr.vmem [resolvable:$true] %s332
          %335 = dma.hbm_to_vmem [thread:$0]  %s3, 16, %s333, [#allocation3]
        $region20: #{tpu_custom_call.1} parent=11 // pred_fallthru
          _
        // Predicated region
        $region21: #{tpu_custom_call.1} parent=11 // pred_check
          %p336 = pneg %p134
        $region22: #{tpu_custom_call.1} parent=11 // pred_check_branch
          %338 = sbr.rel (%p336) target = $region24
        $region23: #{tpu_custom_call.1} parent=11 // pred_region
          _
        $region24: #{tpu_custom_call.1} parent=11 // pred_fallthru
          _
        // Predicated region
        $region25: #{tpu_custom_call.1} parent=11 // pred_check
          %p339 = pneg %p155
        $region26: #{tpu_custom_call.1} parent=11 // pred_check_branch
          %341 = sbr.rel (%p339) target = $region28
        $region27: #{tpu_custom_call.1} parent=11 // pred_region
          _
        $region28: #{tpu_custom_call.1} parent=11 // pred_fallthru
          _
        // Predicated region
        $region29: #{tpu_custom_call.1} parent=11 // pred_check
          %p342 = pneg %p176
        $region30: #{tpu_custom_call.1} parent=11 // pred_check_branch
          %344 = sbr.rel (%p342) target = $region32
        $region31: #{tpu_custom_call.1} parent=11 // pred_region
          _
        $region32: #{tpu_custom_call.1} parent=11 // pred_fallthru
          _
        // Predicated region
        $region33: #{tpu_custom_call.1} parent=11 // pred_check
          %p345 = pneg %p197
        $region34: #{tpu_custom_call.1} parent=11 // pred_check_branch
          %347 = sbr.rel (%p345) target = $region36
        $region35: #{tpu_custom_call.1} parent=11 // pred_region
          _
        $region36: #{tpu_custom_call.1} parent=11 // pred_fallthru
          _
        // Predicated region
        $region37: #{tpu_custom_call.1} parent=11 // pred_check
          %p348 = pneg %p218
        $region38: #{tpu_custom_call.1} parent=11 // pred_check_branch
          %350 = sbr.rel (%p348) target = $region40
        $region39: #{tpu_custom_call.1} parent=11 // pred_region
          _
        $region40: #{tpu_custom_call.1} parent=11 // pred_fallthru
          _
        // Predicated region
        $region41: #{tpu_custom_call.1} parent=11 // pred_check
          %p351 = pneg %p239
        $region42: #{tpu_custom_call.1} parent=11 // pred_check_branch
          %353 = sbr.rel (%p351) target = $region44
        $region43: #{tpu_custom_call.1} parent=11 // pred_region
          _
        $region44: #{tpu_custom_call.1} parent=11 // pred_fallthru
          _
        // Predicated region
        $region45: #{tpu_custom_call.1} parent=11 // pred_check
          %p354 = pneg %p260
        $region46: #{tpu_custom_call.1} parent=11 // pred_check_branch
          %356 = sbr.rel (%p354) target = $region48
        $region47: #{tpu_custom_call.1} parent=11 // pred_region
          _
        $region48: #{tpu_custom_call.1} parent=11 // pred_fallthru
          _
        // Predicated region
        $region49: #{tpu_custom_call.1} parent=11 // pred_check
          %p357 = pneg %p281
        $region50: #{tpu_custom_call.1} parent=11 // pred_check_branch
          %359 = sbr.rel (%p357) target = $region52
        $region51: #{tpu_custom_call.1} parent=11 // pred_region
          _
        $region52: #{tpu_custom_call.1} parent=11 // pred_fallthru
          _
      $region12: #{tpu_custom_call.1} parent=5 // pred_fallthru
        _
      %p360 = scmp.lt.s32.totalorder %s19, 2
      // Predicated region
      $region53: #{tpu_custom_call.1} parent=5 // pred_check
        %p361 = pneg %p360
      $region54: #{tpu_custom_call.1} parent=5 // pred_check_branch
        %363 = sbr.rel (%p361) target = $region56
      $region55: #{tpu_custom_call.1} parent=5 // pred_region
        // Predicated region
        $region57: #{tpu_custom_call.1} parent=55 // pred_check
          %p364 = pneg %p39
        $region58: #{tpu_custom_call.1} parent=55 // pred_check_branch
          %366 = sbr.rel (%p364) target = $region60
        $region59: #{tpu_custom_call.1} parent=55 // pred_region
          %s367 = smul.u32 4, %s19
          %p368 = scmp.lt.s32.totalorder %s367, 7
          %s369 = scalar_select %p368, %s367, 7
          %s370 = smul.addr %s369, 8
          %s371 = scalar_lea.vmem %s0, %s370
          %s372 = smul.u32 4, %s19
        $region60: #{tpu_custom_call.1} parent=55 // pred_fallthru
          _
        // Predicated region
        $region61: #{tpu_custom_call.1} parent=55 // pred_check
          %p373 = pneg %p65
        $region62: #{tpu_custom_call.1} parent=55 // pred_check_branch
          %375 = sbr.rel (%p373) target = $region64
        $region63: #{tpu_custom_call.1} parent=55 // pred_region
          %s376 = smul.u32 4, %s19
          %p377 = scmp.lt.s32.totalorder %s376, 7
          %s378 = scalar_select %p377, %s376, 7
          %s379 = smul.addr %s378, 8
          %s380 = scalar_lea.vmem %s1, %s379
          %s381 = smul.u32 4, %s19
        $region64: #{tpu_custom_call.1} parent=55 // pred_fallthru
          _
      $region56: #{tpu_custom_call.1} parent=5 // pred_fallthru
        _
      %p382 = scmp.le.s32.totalorder 1, %s19
      %p383 = scmp.lt.s32.totalorder %s19, 3
      %p384 = pnand %p382, %p383
      %p385 = pneg %p384
      // Predicated region
      $region65: #{tpu_custom_call.1} parent=5 // pred_check
        _
      $region66: #{tpu_custom_call.1} parent=5 // pred_check_branch
        %387 = sbr.rel (%p384) target = $region68
      $region67: #{tpu_custom_call.1} parent=5 // pred_region
        %s388 = ssub.s32 %s19, 1
        // Predicated region
        $region69: #{tpu_custom_call.1} parent=67 // pred_check
          %p389 = pneg %p113
        $region70: #{tpu_custom_call.1} parent=67 // pred_check_branch
          %391 = sbr.rel (%p389) target = $region72
        $region71: #{tpu_custom_call.1} parent=67 // pred_region
          %392 = dma.done [#allocation3], 16
        $region72: #{tpu_custom_call.1} parent=67 // pred_fallthru
          _
        %s393 = smul.u32 4, %s24
        %p394 = scmp.lt.s32.totalorder %s393, 7
        %s395 = scalar_select %p394, %s393, 7
        %s396 = smul.addr %s395, 8
        %s397 = scalar_lea.vmem %s0, %s396
        %p398 = pneg %p45
        %p399 = pneg %p42
        %s400 = smul.u32 4, %s24
        %p401 = scmp.lt.s32.totalorder %s400, 7
        %s402 = scalar_select %p401, %s400, 7
        %s403 = smul.addr %s402, 8
        %s404 = scalar_lea.vmem %s1, %s403
        %p405 = pneg %p71
        %p406 = pneg %p68
        %p407 = pneg %p92
        %p408 = pneg %p89
        %p409 = pneg %p113
        %p410 = pneg %p110
        %p411 = pneg %p134
        %p412 = pneg %p131
        %p413 = pneg %p155
        %p414 = pneg %p152
        %p415 = pneg %p176
        %p416 = pneg %p173
        %p417 = pneg %p197
        %p418 = pneg %p194
        %p419 = pneg %p218
        %p420 = pneg %p215
        %p421 = pneg %p239
        %p422 = pneg %p236
        %p423 = pneg %p260
        %p424 = pneg %p257
        %p425 = pneg %p281
        %p426 = pneg %p278
        %p427 = pneg %p307
        %p428 = pneg %p304
        %s429 = smul.u32 4, %s24
        %p430 = scmp.lt.s32.totalorder %s429, 7
        %s431 = scalar_select %p430, %s429, 7
        %s432 = smul.addr %s431, 8
        %s433 = scalar_lea.vmem %s12, %s432
        %s434 = smul.u32 4, %s24
        %p435 = scmp.lt.s32.totalorder %s434, 7
        %s436 = scalar_select %p435, %s434, 7
        %s437 = smul.addr %s436, 8
        %s438 = scalar_lea.vmem %s0, %s437
        %s439 = smul.u32 4, %s24
        %s440 = smul.u32 4, %s24
        %p441 = scmp.lt.s32.totalorder %s440, 7
        %s442 = scalar_select %p441, %s440, 7
        %s443 = smul.addr %s442, 8
        %s444 = scalar_lea.vmem %s1, %s443
        %s445 = smul.u32 4, %s24
        %s446 = smul.u32 4, %s24
        %p447 = scmp.lt.s32.totalorder %s446, 7
        %s448 = scalar_select %p447, %s446, 7
        %s449 = smul.addr %s448, 8
        %s450 = scalar_lea.vmem %s12, %s449
        %s451 = smul.u32 4, %s24
        %v453 = vld [vmem:[%s438] sm:$0xff]
        %v454 = vld [vmem:[%s438 + $0x8] sm:$0xff]
        %v455 = vld [vmem:[%s438 + $0x10] sm:$0xff]
        %v456 = vld [vmem:[%s438 + $0x18] sm:$0xff]
        %v457 = vld [vmem:[%s444] sm:$0xff]
        %v458 = vld [vmem:[%s444 + $0x8] sm:$0xff]
        %v459 = vld [vmem:[%s444 + $0x10] sm:$0xff]
        %v460 = vld [vmem:[%s444 + $0x18] sm:$0xff]
        %v461 = vld [vmem:[%s2] sm:$0xff]
        %463 = vset.pattern.permute.xlu0 0
        %464 = vperm.xlu0 %463, %v453
        %v465 = vpop.permute.xlu0 %464
        %468 = vset.pattern.permute.xlu0 0
        %469 = vperm.xlu0 %468, %v454
        %v470 = vpop.permute.xlu0 %469
        %473 = vset.pattern.permute.xlu0 0
        %474 = vperm.xlu0 %473, %v455
        %v475 = vpop.permute.xlu0 %474
        %478 = vset.pattern.permute.xlu0 0
        %479 = vperm.xlu0 %478, %v456
        %v480 = vpop.permute.xlu0 %479
        %v482 = vlaneseq
        %v483 = vshrl.u32 %v482, 7
        %v484 = vsub.s32 0, %v483
        %v485 = vrot.slane %v461, %v484
        %v486 = vmul.f32 %v465, %v485
        %v487 = vmul.f32 %v470, %v485
        %v488 = vmul.f32 %v475, %v485
        %v489 = vmul.f32 %v480, %v485
        %490 = vset.pattern.permute.xlu0 1
        %491 = vperm.xlu0 %490, %v453
        %v492 = vpop.permute.xlu0 %491
        %494 = vset.pattern.permute.xlu0 1
        %495 = vperm.xlu0 %494, %v454
        %v496 = vpop.permute.xlu0 %495
        %498 = vset.pattern.permute.xlu0 1
        %499 = vperm.xlu0 %498, %v455
        %v500 = vpop.permute.xlu0 %499
        %502 = vset.pattern.permute.xlu0 1
        %503 = vperm.xlu0 %502, %v456
        %v504 = vpop.permute.xlu0 %503
        %v506 = vlaneseq
        %v507 = vshrl.u32 %v506, 7
        %v508 = vsub.s32 1, %v507
        %v509 = vrot.slane %v461, %v508
        %v510 = vmul.f32 %v492, %v509
        %v511 = vmul.f32 %v496, %v509
        %v512 = vmul.f32 %v500, %v509
        %v513 = vmul.f32 %v504, %v509
        %v514 = vadd.f32 %v486, %v510
        %v515 = vadd.f32 %v487, %v511
        %v516 = vadd.f32 %v488, %v512
        %v517 = vadd.f32 %v489, %v513
        %519 = vset.pattern.permute.xlu0 0
        %520 = vperm.xlu0 %519, %v457
        %v521 = vpop.permute.xlu0 %520
        %524 = vset.pattern.permute.xlu0 0
        %525 = vperm.xlu0 %524, %v458
        %v526 = vpop.permute.xlu0 %525
        %529 = vset.pattern.permute.xlu0 0
        %530 = vperm.xlu0 %529, %v459
        %v531 = vpop.permute.xlu0 %530
        %534 = vset.pattern.permute.xlu0 0
        %535 = vperm.xlu0 %534, %v460
        %v536 = vpop.permute.xlu0 %535
        %v538 = vlaneseq
        %v539 = vshrl.u32 %v538, 7
        %v540 = vsub.s32 2, %v539
        %v541 = vrot.slane %v461, %v540
        %v542 = vmul.f32 %v521, %v541
        %v543 = vmul.f32 %v526, %v541
        %v544 = vmul.f32 %v531, %v541
        %v545 = vmul.f32 %v536, %v541
        %v546 = vadd.f32 %v514, %v542
        %v547 = vadd.f32 %v515, %v543
        %v548 = vadd.f32 %v516, %v544
        %v549 = vadd.f32 %v517, %v545
        %v550 = vld [vmem:[#allocation2] sm:$0x1]
        %v552 = vlaneseq
        %v553 = vshrl.u32 %v552, 7
        %v554 = vsub.s32 0, %v553
        %v555 = vrot.slane %v550, %v554
        %v557 = vadd.f32 %v546, %v555
        %v558 = vadd.f32 %v547, %v555
        %v559 = vadd.f32 %v548, %v555
        %v560 = vadd.f32 %v549, %v555
        %v561 = vmax.f32 %v557, 0.0
        %v562 = vmax.f32 %v558, 0.0
        %v563 = vmax.f32 %v559, 0.0
        %v564 = vmax.f32 %v560, 0.0
        %v565 = vpack.c.bf16 %v562, %v561
        %v566 = vpack.c.bf16 %v564, %v563
        %v567 = vld [vmem:[%s4] sm:$0xf]
        %v568 = vld [vmem:[%s4 + $0x4] sm:$0xf]
        %v569 = vld [vmem:[%s4 + $0x8] sm:$0xf]
        %v570 = vld [vmem:[%s4 + $0xc] sm:$0xf]
        %v571 = vld [vmem:[%s4 + $0x10] sm:$0xf]
        %v572 = vld [vmem:[%s4 + $0x14] sm:$0xf]
        %v573 = vld [vmem:[%s4 + $0x18] sm:$0xf]
        %v574 = vld [vmem:[%s4 + $0x1c] sm:$0xf]
        %v575 = vld [vmem:[%s4 + $0x20] sm:$0xf]
        %v576 = vld [vmem:[%s4 + $0x24] sm:$0xf]
        %v577 = vld [vmem:[%s4 + $0x28] sm:$0xf]
        %v578 = vld [vmem:[%s4 + $0x2c] sm:$0xf]
        %v579 = vld [vmem:[%s4 + $0x30] sm:$0xf]
        %v580 = vld [vmem:[%s4 + $0x34] sm:$0xf]
        %v581 = vld [vmem:[%s4 + $0x38] sm:$0xf]
        %v582 = vld [vmem:[%s4 + $0x3c] sm:$0xf]
        %v583 = vld [vmem:[%s5] sm:$0x1]
        %v585 = vlaneseq
        %v586 = vshrl.u32 %v585, 7
        %v587 = vsub.s32 0, %v586
        %v588 = vrot.slane %v583, %v587
        %v606 = vunpack.c.l.b16 %v567
        %v607 = vunpack.c.l.b16 %v568
        %v608 = vunpack.c.l.b16 %v569
        %v609 = vunpack.c.l.b16 %v570
        %v610 = vunpack.c.l.b16 %v571
        %v611 = vunpack.c.l.b16 %v572
        %v612 = vunpack.c.l.b16 %v573
        %v613 = vunpack.c.l.b16 %v574
        %v614 = vunpack.c.l.b16 %v575
        %v615 = vunpack.c.l.b16 %v576
        %v616 = vunpack.c.l.b16 %v577
        %v617 = vunpack.c.l.b16 %v578
        %v618 = vunpack.c.l.b16 %v579
        %v619 = vunpack.c.l.b16 %v580
        %v620 = vunpack.c.l.b16 %v581
        %v621 = vunpack.c.l.b16 %v582
        %v622 = vpack.c.b16 %v607, %v606
        %v623 = vpack.c.b16 %v609, %v608
        %v624 = vpack.c.b16 %v611, %v610
        %v625 = vpack.c.b16 %v613, %v612
        %v626 = vpack.c.b16 %v615, %v614
        %v627 = vpack.c.b16 %v617, %v616
        %v628 = vpack.c.b16 %v619, %v618
        %v629 = vpack.c.b16 %v621, %v620
        %638 = vmatprep.subr.bf16.mxu0 0
        %639 = vmatpush1.bf16.msra.mxu0 %v629
        %640 = vmatprep.subr.bf16.mxu0 0
        %641 = vmatpush1.bf16.msra.mxu0 %v628
        %642 = vmatprep.subr.bf16.mxu0 0
        %643 = vmatpush1.bf16.msra.mxu0 %v627
        %644 = vmatprep.subr.bf16.mxu0 0
        %645 = vmatpush1.bf16.msra.mxu0 %v626
        %646 = vmatprep.subr.bf16.mxu0 0
        %647 = vmatpush1.bf16.msra.mxu0 %v625
        %648 = vmatprep.subr.bf16.mxu0 0
        %649 = vmatpush1.bf16.msra.mxu0 %v624
        %650 = vmatprep.subr.bf16.mxu0 0
        %651 = vmatpush1.bf16.msra.mxu0 %v623
        %652 = vmatprep.subr.bf16.mxu0 0
        %653 = vmatpush1.bf16.msra.mxu0 %v622
        %654 = vmatprep.subr.bf16.mxu0 0
        %655 = vmatpush2.bf16.msra.mxu0 0
        %656 = vmatprep.subr.bf16.mxu0 0
        %657 = vmatpush2.bf16.msra.mxu0 0
        %658 = vmatprep.subr.bf16.mxu0 0
        %659 = vmatpush2.bf16.msra.mxu0 0
        %660 = vmatprep.subr.bf16.mxu0 0
        %661 = vmatpush2.bf16.msra.mxu0 0
        %662 = vmatprep.subr.bf16.mxu0 0
        %663 = vmatpush2.bf16.msra.mxu0 0
        %664 = vmatprep.subr.bf16.mxu0 0
        %665 = vmatpush2.bf16.msra.mxu0 0
        %666 = vmatprep.subr.bf16.mxu0 0
        %667 = vmatpush2.bf16.msra.mxu0 0
        %668 = vmatprep.subr.bf16.mxu0 0
        %669 = vmatpush2.bf16.msra.mxu0 0
        %670 = vmatprep.mubr.bf16.mxu0 0
        %671 = vmatmul.mubr.bf16.gmra.mxu0 %v565
        %v672 = vpop.f32.mrf.mxu0
        %v673 = vadd.f32 %v588, %v672
        %v674 = vpop.f32.mrf.mxu0
        %v675 = vpop.f32.mrf.mxu0
        %v676 = vadd.f32 %v588, %v675
        %v677 = vpop.f32.mrf.mxu0
        %678 = vmatprep.mubr.bf16.mxu0 0
        %679 = vmatmul.mubr.bf16.gmra.mxu0 %v566
        %v680 = vpop.f32.mrf.mxu0
        %v681 = vadd.f32 %v588, %v680
        %v682 = vpop.f32.mrf.mxu0
        %v683 = vpop.f32.mrf.mxu0
        %v684 = vadd.f32 %v588, %v683
        %v685 = vpop.f32.mrf.mxu0
        %686 = vdwg.mxu0
        %v687 = vmax.f32 %v673, 0.0
        %v688 = vmax.f32 %v676, 0.0
        %v689 = vmax.f32 %v681, 0.0
        %v690 = vmax.f32 %v684, 0.0
        %v691 = vpack.c.bf16 %v688, %v687
        %v692 = vpack.c.bf16 %v690, %v689
        %v693 = vld [vmem:[%s6] sm:$0xf]
        %v694 = vld [vmem:[%s6 + $0x4] sm:$0xf]
        %v695 = vld [vmem:[%s6 + $0x8] sm:$0xf]
        %v696 = vld [vmem:[%s6 + $0xc] sm:$0xf]
        %v697 = vld [vmem:[%s6 + $0x10] sm:$0xf]
        %v698 = vld [vmem:[%s6 + $0x14] sm:$0xf]
        %v699 = vld [vmem:[%s6 + $0x18] sm:$0xf]
        %v700 = vld [vmem:[%s6 + $0x1c] sm:$0xf]
        %v701 = vld [vmem:[%s6 + $0x20] sm:$0xf]
        %v702 = vld [vmem:[%s6 + $0x24] sm:$0xf]
        %v703 = vld [vmem:[%s6 + $0x28] sm:$0xf]
        %v704 = vld [vmem:[%s6 + $0x2c] sm:$0xf]
        %v705 = vld [vmem:[%s6 + $0x30] sm:$0xf]
        %v706 = vld [vmem:[%s6 + $0x34] sm:$0xf]
        %v707 = vld [vmem:[%s6 + $0x38] sm:$0xf]
        %v708 = vld [vmem:[%s6 + $0x3c] sm:$0xf]
        %v709 = vld [vmem:[%s7] sm:$0x1]
        %v711 = vlaneseq
        %v712 = vshrl.u32 %v711, 7
        %v713 = vsub.s32 0, %v712
        %v714 = vrot.slane %v709, %v713
        %v732 = vunpack.c.l.b16 %v693
        %v733 = vunpack.c.l.b16 %v694
        %v734 = vunpack.c.l.b16 %v695
        %v735 = vunpack.c.l.b16 %v696
        %v736 = vunpack.c.l.b16 %v697
        %v737 = vunpack.c.l.b16 %v698
        %v738 = vunpack.c.l.b16 %v699
        %v739 = vunpack.c.l.b16 %v700
        %v740 = vunpack.c.l.b16 %v701
        %v741 = vunpack.c.l.b16 %v702
        %v742 = vunpack.c.l.b16 %v703
        %v743 = vunpack.c.l.b16 %v704
        %v744 = vunpack.c.l.b16 %v705
        %v745 = vunpack.c.l.b16 %v706
        %v746 = vunpack.c.l.b16 %v707
        %v747 = vunpack.c.l.b16 %v708
        %v748 = vpack.c.b16 %v733, %v732
        %v749 = vpack.c.b16 %v735, %v734
        %v750 = vpack.c.b16 %v737, %v736
        %v751 = vpack.c.b16 %v739, %v738
        %v752 = vpack.c.b16 %v741, %v740
        %v753 = vpack.c.b16 %v743, %v742
        %v754 = vpack.c.b16 %v745, %v744
        %v755 = vpack.c.b16 %v747, %v746
        %764 = vmatprep.subr.bf16.mxu0 0
        %765 = vmatpush1.bf16.msra.mxu0 %v755
        %766 = vmatprep.subr.bf16.mxu0 0
        %767 = vmatpush1.bf16.msra.mxu0 %v754
        %768 = vmatprep.subr.bf16.mxu0 0
        %769 = vmatpush1.bf16.msra.mxu0 %v753
        %770 = vmatprep.subr.bf16.mxu0 0
        %771 = vmatpush1.bf16.msra.mxu0 %v752
        %772 = vmatprep.subr.bf16.mxu0 0
        %773 = vmatpush1.bf16.msra.mxu0 %v751
        %774 = vmatprep.subr.bf16.mxu0 0
        %775 = vmatpush1.bf16.msra.mxu0 %v750
        %776 = vmatprep.subr.bf16.mxu0 0
        %777 = vmatpush1.bf16.msra.mxu0 %v749
        %778 = vmatprep.subr.bf16.mxu0 0
        %779 = vmatpush1.bf16.msra.mxu0 %v748
        %780 = vmatprep.subr.bf16.mxu0 0
        %781 = vmatpush2.bf16.msra.mxu0 0
        %782 = vmatprep.subr.bf16.mxu0 0
        %783 = vmatpush2.bf16.msra.mxu0 0
        %784 = vmatprep.subr.bf16.mxu0 0
        %785 = vmatpush2.bf16.msra.mxu0 0
        %786 = vmatprep.subr.bf16.mxu0 0
        %787 = vmatpush2.bf16.msra.mxu0 0
        %788 = vmatprep.subr.bf16.mxu0 0
        %789 = vmatpush2.bf16.msra.mxu0 0
        %790 = vmatprep.subr.bf16.mxu0 0
        %791 = vmatpush2.bf16.msra.mxu0 0
        %792 = vmatprep.subr.bf16.mxu0 0
        %793 = vmatpush2.bf16.msra.mxu0 0
        %794 = vmatprep.subr.bf16.mxu0 0
        %795 = vmatpush2.bf16.msra.mxu0 0
        %796 = vmatprep.mubr.bf16.mxu0 0
        %797 = vmatmul.mubr.bf16.gmra.mxu0 %v691
        %v798 = vpop.f32.mrf.mxu0
        %v799 = vadd.f32 %v714, %v798
        %v800 = vpop.f32.mrf.mxu0
        %v801 = vpop.f32.mrf.mxu0
        %v802 = vadd.f32 %v714, %v801
        %v803 = vpop.f32.mrf.mxu0
        %804 = vmatprep.mubr.bf16.mxu0 0
        %805 = vmatmul.mubr.bf16.gmra.mxu0 %v692
        %v806 = vpop.f32.mrf.mxu0
        %v807 = vadd.f32 %v714, %v806
        %v808 = vpop.f32.mrf.mxu0
        %v809 = vpop.f32.mrf.mxu0
        %v810 = vadd.f32 %v714, %v809
        %v811 = vpop.f32.mrf.mxu0
        %812 = vdwg.mxu0
        %v813 = vmax.f32 %v799, 0.0
        %v814 = vmax.f32 %v802, 0.0
        %v815 = vmax.f32 %v807, 0.0
        %v816 = vmax.f32 %v810, 0.0
        %v817 = vpack.c.bf16 %v814, %v813
        %v818 = vpack.c.bf16 %v816, %v815
        %v819 = vld [vmem:[%s8] sm:$0xf]
        %v820 = vld [vmem:[%s8 + $0x4] sm:$0xf]
        %v821 = vld [vmem:[%s8 + $0x8] sm:$0xf]
        %v822 = vld [vmem:[%s8 + $0xc] sm:$0xf]
        %v823 = vld [vmem:[%s8 + $0x10] sm:$0xf]
        %v824 = vld [vmem:[%s8 + $0x14] sm:$0xf]
        %v825 = vld [vmem:[%s8 + $0x18] sm:$0xf]
        %v826 = vld [vmem:[%s8 + $0x1c] sm:$0xf]
        %v827 = vld [vmem:[%s8 + $0x20] sm:$0xf]
        %v828 = vld [vmem:[%s8 + $0x24] sm:$0xf]
        %v829 = vld [vmem:[%s8 + $0x28] sm:$0xf]
        %v830 = vld [vmem:[%s8 + $0x2c] sm:$0xf]
        %v831 = vld [vmem:[%s8 + $0x30] sm:$0xf]
        %v832 = vld [vmem:[%s8 + $0x34] sm:$0xf]
        %v833 = vld [vmem:[%s8 + $0x38] sm:$0xf]
        %v834 = vld [vmem:[%s8 + $0x3c] sm:$0xf]
        %v835 = vld [vmem:[%s9] sm:$0x1]
        %v837 = vlaneseq
        %v838 = vshrl.u32 %v837, 7
        %v839 = vsub.s32 0, %v838
        %v840 = vrot.slane %v835, %v839
        %v858 = vunpack.c.l.b16 %v819
        %v859 = vunpack.c.l.b16 %v820
        %v860 = vunpack.c.l.b16 %v821
        %v861 = vunpack.c.l.b16 %v822
        %v862 = vunpack.c.l.b16 %v823
        %v863 = vunpack.c.l.b16 %v824
        %v864 = vunpack.c.l.b16 %v825
        %v865 = vunpack.c.l.b16 %v826
        %v866 = vunpack.c.l.b16 %v827
        %v867 = vunpack.c.l.b16 %v828
        %v868 = vunpack.c.l.b16 %v829
        %v869 = vunpack.c.l.b16 %v830
        %v870 = vunpack.c.l.b16 %v831
        %v871 = vunpack.c.l.b16 %v832
        %v872 = vunpack.c.l.b16 %v833
        %v873 = vunpack.c.l.b16 %v834
        %v874 = vpack.c.b16 %v859, %v858
        %v875 = vpack.c.b16 %v861, %v860
        %v876 = vpack.c.b16 %v863, %v862
        %v877 = vpack.c.b16 %v865, %v864
        %v878 = vpack.c.b16 %v867, %v866
        %v879 = vpack.c.b16 %v869, %v868
        %v880 = vpack.c.b16 %v871, %v870
        %v881 = vpack.c.b16 %v873, %v872
        %890 = vmatprep.subr.bf16.mxu0 0
        %891 = vmatpush1.bf16.msra.mxu0 %v881
        %892 = vmatprep.subr.bf16.mxu0 0
        %893 = vmatpush1.bf16.msra.mxu0 %v880
        %894 = vmatprep.subr.bf16.mxu0 0
        %895 = vmatpush1.bf16.msra.mxu0 %v879
        %896 = vmatprep.subr.bf16.mxu0 0
        %897 = vmatpush1.bf16.msra.mxu0 %v878
        %898 = vmatprep.subr.bf16.mxu0 0
        %899 = vmatpush1.bf16.msra.mxu0 %v877
        %900 = vmatprep.subr.bf16.mxu0 0
        %901 = vmatpush1.bf16.msra.mxu0 %v876
        %902 = vmatprep.subr.bf16.mxu0 0
        %903 = vmatpush1.bf16.msra.mxu0 %v875
        %904 = vmatprep.subr.bf16.mxu0 0
        %905 = vmatpush1.bf16.msra.mxu0 %v874
        %906 = vmatprep.subr.bf16.mxu0 0
        %907 = vmatpush2.bf16.msra.mxu0 0
        %908 = vmatprep.subr.bf16.mxu0 0
        %909 = vmatpush2.bf16.msra.mxu0 0
        %910 = vmatprep.subr.bf16.mxu0 0
        %911 = vmatpush2.bf16.msra.mxu0 0
        %912 = vmatprep.subr.bf16.mxu0 0
        %913 = vmatpush2.bf16.msra.mxu0 0
        %914 = vmatprep.subr.bf16.mxu0 0
        %915 = vmatpush2.bf16.msra.mxu0 0
        %916 = vmatprep.subr.bf16.mxu0 0
        %917 = vmatpush2.bf16.msra.mxu0 0
        %918 = vmatprep.subr.bf16.mxu0 0
        %919 = vmatpush2.bf16.msra.mxu0 0
        %920 = vmatprep.subr.bf16.mxu0 0
        %921 = vmatpush2.bf16.msra.mxu0 0
        %922 = vmatprep.mubr.bf16.mxu0 0
        %923 = vmatmul.mubr.bf16.gmra.mxu0 %v817
        %v924 = vpop.f32.mrf.mxu0
        %v925 = vadd.f32 %v840, %v924
        %v926 = vpop.f32.mrf.mxu0
        %v927 = vpop.f32.mrf.mxu0
        %v928 = vadd.f32 %v840, %v927
        %v929 = vpop.f32.mrf.mxu0
        %930 = vmatprep.mubr.bf16.mxu0 0
        %931 = vmatmul.mubr.bf16.gmra.mxu0 %v818
        %v932 = vpop.f32.mrf.mxu0
        %v933 = vadd.f32 %v840, %v932
        %v934 = vpop.f32.mrf.mxu0
        %v935 = vpop.f32.mrf.mxu0
        %v936 = vadd.f32 %v840, %v935
        %v937 = vpop.f32.mrf.mxu0
        %938 = vdwg.mxu0
        %v939 = vmax.f32 %v925, 0.0
        %v940 = vmax.f32 %v928, 0.0
        %v941 = vmax.f32 %v933, 0.0
        %v942 = vmax.f32 %v936, 0.0
        %v943 = vpack.c.bf16 %v940, %v939
        %v944 = vpack.c.bf16 %v942, %v941
        %v945 = vld [vmem:[%s10] sm:$0xf]
        %v946 = vld [vmem:[%s10 + $0x4] sm:$0xf]
        %v947 = vld [vmem:[%s10 + $0x8] sm:$0xf]
        %v948 = vld [vmem:[%s10 + $0xc] sm:$0xf]
        %v949 = vld [vmem:[%s10 + $0x10] sm:$0xf]
        %v950 = vld [vmem:[%s10 + $0x14] sm:$0xf]
        %v951 = vld [vmem:[%s10 + $0x18] sm:$0xf]
        %v952 = vld [vmem:[%s10 + $0x1c] sm:$0xf]
        %v953 = vld [vmem:[%s10 + $0x20] sm:$0xf]
        %v954 = vld [vmem:[%s10 + $0x24] sm:$0xf]
        %v955 = vld [vmem:[%s10 + $0x28] sm:$0xf]
        %v956 = vld [vmem:[%s10 + $0x2c] sm:$0xf]
        %v957 = vld [vmem:[%s10 + $0x30] sm:$0xf]
        %v958 = vld [vmem:[%s10 + $0x34] sm:$0xf]
        %v959 = vld [vmem:[%s10 + $0x38] sm:$0xf]
        %v960 = vld [vmem:[%s10 + $0x3c] sm:$0xf]
        %v961 = vld [vmem:[%s11] sm:$0x1]
        %v963 = vlaneseq
        %v964 = vshrl.u32 %v963, 7
        %v965 = vsub.s32 0, %v964
        %v966 = vrot.slane %v961, %v965
        %v984 = vunpack.c.l.b16 %v945
        %v985 = vunpack.c.l.b16 %v946
        %v986 = vunpack.c.l.b16 %v947
        %v987 = vunpack.c.l.b16 %v948
        %v988 = vunpack.c.l.b16 %v949
        %v989 = vunpack.c.l.b16 %v950
        %v990 = vunpack.c.l.b16 %v951
        %v991 = vunpack.c.l.b16 %v952
        %v992 = vunpack.c.l.b16 %v953
        %v993 = vunpack.c.l.b16 %v954
        %v994 = vunpack.c.l.b16 %v955
        %v995 = vunpack.c.l.b16 %v956
        %v996 = vunpack.c.l.b16 %v957
        %v997 = vunpack.c.l.b16 %v958
        %v998 = vunpack.c.l.b16 %v959
        %v999 = vunpack.c.l.b16 %v960
        %v1000 = vpack.c.b16 %v985, %v984
        %v1001 = vpack.c.b16 %v987, %v986
        %v1002 = vpack.c.b16 %v989, %v988
        %v1003 = vpack.c.b16 %v991, %v990
        %v1004 = vpack.c.b16 %v993, %v992
        %v1005 = vpack.c.b16 %v995, %v994
        %v1006 = vpack.c.b16 %v997, %v996
        %v1007 = vpack.c.b16 %v999, %v998
        %1016 = vmatprep.subr.bf16.mxu0 0
        %1017 = vmatpush1.bf16.msra.mxu0 %v1007
        %1018 = vmatprep.subr.bf16.mxu0 0
        %1019 = vmatpush1.bf16.msra.mxu0 %v1006
        %1020 = vmatprep.subr.bf16.mxu0 0
        %1021 = vmatpush1.bf16.msra.mxu0 %v1005
        %1022 = vmatprep.subr.bf16.mxu0 0
        %1023 = vmatpush1.bf16.msra.mxu0 %v1004
        %1024 = vmatprep.subr.bf16.mxu0 0
        %1025 = vmatpush1.bf16.msra.mxu0 %v1003
        %1026 = vmatprep.subr.bf16.mxu0 0
        %1027 = vmatpush1.bf16.msra.mxu0 %v1002
        %1028 = vmatprep.subr.bf16.mxu0 0
        %1029 = vmatpush1.bf16.msra.mxu0 %v1001
        %1030 = vmatprep.subr.bf16.mxu0 0
        %1031 = vmatpush1.bf16.msra.mxu0 %v1000
        %1032 = vmatprep.subr.bf16.mxu0 0
        %1033 = vmatpush2.bf16.msra.mxu0 0
        %1034 = vmatprep.subr.bf16.mxu0 0
        %1035 = vmatpush2.bf16.msra.mxu0 0
        %1036 = vmatprep.subr.bf16.mxu0 0
        %1037 = vmatpush2.bf16.msra.mxu0 0
        %1038 = vmatprep.subr.bf16.mxu0 0
        %1039 = vmatpush2.bf16.msra.mxu0 0
        %1040 = vmatprep.subr.bf16.mxu0 0
        %1041 = vmatpush2.bf16.msra.mxu0 0
        %1042 = vmatprep.subr.bf16.mxu0 0
        %1043 = vmatpush2.bf16.msra.mxu0 0
        %1044 = vmatprep.subr.bf16.mxu0 0
        %1045 = vmatpush2.bf16.msra.mxu0 0
        %1046 = vmatprep.subr.bf16.mxu0 0
        %1047 = vmatpush2.bf16.msra.mxu0 0
        %1048 = vmatprep.mubr.bf16.mxu0 0
        %1049 = vmatmul.mubr.bf16.gmra.mxu0 %v943
        %v1050 = vpop.f32.mrf.mxu0
        %v1051 = vadd.f32 %v966, %v1050
        %v1052 = vpop.f32.mrf.mxu0
        %v1053 = vpop.f32.mrf.mxu0
        %v1054 = vadd.f32 %v966, %v1053
        %v1055 = vpop.f32.mrf.mxu0
        %1056 = vmatprep.mubr.bf16.mxu0 0
        %1057 = vmatmul.mubr.bf16.gmra.mxu0 %v944
        %v1058 = vpop.f32.mrf.mxu0
        %v1059 = vadd.f32 %v966, %v1058
        %v1060 = vpop.f32.mrf.mxu0
        %v1061 = vpop.f32.mrf.mxu0
        %v1062 = vadd.f32 %v966, %v1061
        %v1063 = vpop.f32.mrf.mxu0
        %1064 = vdwg.mxu0
        %vm1065 = vcmask 64512
        %1066 = vst.msk [vmem:[%s450] sm:$0xff] %vm1065, %v1051
        %1067 = vst.msk [vmem:[%s450 + $0x8] sm:$0xff] %vm1065, %v1054
        %1068 = vst.msk [vmem:[%s450 + $0x10] sm:$0xff] %vm1065, %v1059
        %1069 = vst.msk [vmem:[%s450 + $0x18] sm:$0xff] %vm1065, %v1062
        %s1070 = smul.u32 4, %s24
        %p1071 = scmp.lt.s32.totalorder %s1070, 7
        %s1072 = scalar_select %p1071, %s1070, 7
        %s1073 = smul.addr %s1072, 8
        %s1074 = scalar_lea.vmem %s12, %s1073
        // Predicated region
        $region73: #{tpu_custom_call.1} parent=67 // pred_check
          %p1075 = pneg %p304
        $region74: #{tpu_custom_call.1} parent=67 // pred_check_branch
          %1077 = sbr.rel (%p1075) target = $region76
        $region75: #{tpu_custom_call.1} parent=67 // pred_region
          %s1078 = smul.u32 4, %s24
        $region76: #{tpu_custom_call.1} parent=67 // pred_fallthru
          _
      $region68: #{tpu_custom_call.1} parent=5 // pred_fallthru
        _
      %p1079 = scmp.le.s32.totalorder 2, %s19
      // Predicated region
      $region77: #{tpu_custom_call.1} parent=5 // pred_check
        %p1080 = pneg %p1079
      $region78: #{tpu_custom_call.1} parent=5 // pred_check_branch
        %1082 = sbr.rel (%p1080) target = $region80
      $region79: #{tpu_custom_call.1} parent=5 // pred_region
        %s1083 = ssub.s32 %s19, 2
        // Predicated region
        $region81: #{tpu_custom_call.1} parent=79 // pred_check
          %p1084 = pneg %p310
        $region82: #{tpu_custom_call.1} parent=79 // pred_check_branch
          %1086 = sbr.rel (%p1084) target = $region84
        $region83: #{tpu_custom_call.1} parent=79 // pred_region
          %s1087 = smul.u32 4, %s25
          %p1088 = scmp.lt.s32.totalorder %s1087, 7
          %s1089 = scalar_select %p1088, %s1087, 7
          %s1090 = smul.addr %s1089, 8
          %s1091 = scalar_lea.vmem %s12, %s1090
        $region84: #{tpu_custom_call.1} parent=79 // pred_fallthru
          _
      $region80: #{tpu_custom_call.1} parent=5 // pred_fallthru
        _
    $region6: #{tpu_custom_call.1} parent=1 // loop_footer
      %s23 = sadd.s32 1, %s19
    $region7: #{tpu_custom_call.1} parent=1 // loop_footer_branch
      %18 = sbr.rel target = $region3
    $region8: #{tpu_custom_call.1} parent=1 // loop_exit
      _
    %1092 = vsyncpa [#allocation3], 1
    %s1093 = scalar_lea.sflag [#allocation3], 1
    %1094 = vsyncpa %s1093, 1

</llo_original>
